<compile_context>
chip_gen: v6e
topology: v6e:2x2x1
jax: 0.10.0
libtpu: 0.0.40
codegen_flags: <defaults>
</compile_context>

<pallas_src>
import jax
import jax.numpy as jnp
from jax.experimental import pallas as pl
from jax.experimental.pallas import tpu as pltpu

LANE = 128
BN_EPS = 1e-5


def _round_up(x, m):
    return ((x + m - 1) // m) * m


# ---------------------------------------------------------------------------
# Kernel 1: per batch tile,  h = x @ W1  (no bias, BN cancels it)  +  partial
#           BN statistics (sum, sum of squares) for the two-phase reduction.
# ---------------------------------------------------------------------------
def _linear_stats_kernel(x_ref, w1_ref, h_ref, stats_ref):
    # bf16 operands -> native MXU rate; f32 accumulation.
    x16 = x_ref[...].astype(jnp.bfloat16)
    h = jnp.dot(x16, w1_ref[...], preferred_element_type=jnp.float32)
    h_ref[...] = h

    # Per-tile partial statistics in f32.  (For large TILE_N these reductions can be
    # moved to the otherwise-idle MXU as ones(1,TILE_N) @ h / @ (h*h); at TILE_N<=128
    # the XLU reduce is not the bottleneck.)
    s1 = jnp.sum(h, axis=0, keepdims=True)        # (1, H)
    s2 = jnp.sum(h * h, axis=0, keepdims=True)    # (1, H)
    stats_ref[...] = jnp.concatenate([s1, s2], axis=0).reshape(stats_ref.shape)


# ---------------------------------------------------------------------------
# Kernel 2: per batch tile, folded BN affine -> ReLU -> second Linear.
# ---------------------------------------------------------------------------
def _bn_relu_linear_kernel(h_ref, ss_ref, w2_ref, b2_ref, o_ref):
    h = h_ref[...]                      # f32
    scale = ss_ref[0:1, :]              # packed per-channel scale
    shift = ss_ref[1:2, :]              # packed per-channel shift
    a = jnp.maximum(h * scale + shift, 0.0)        # 2 VPU ops + ReLU, all f32
    o_ref[...] = (
        jnp.dot(a.astype(jnp.bfloat16), w2_ref[...],
                preferred_element_type=jnp.float32)
        + b2_ref[...]
    ).astype(o_ref.dtype)


# ---------------------------------------------------------------------------
# Wrapper
# ---------------------------------------------------------------------------
def projector_forward(x, w1, b1, gamma, beta, w2, b2, *, tile_n=128,
                      vmem_limit_bytes=32 * 1024 * 1024):
    """Projector forward pass.  `b1` is accepted for interface parity but is not used
    on-device: training-mode BatchNorm's mean subtraction cancels it exactly."""
    del b1

    n, k = x.shape
    h_dim = w1.shape[1]
    o_dim = w2.shape[1]

    # Lane-dense padding: every last dim padded to a multiple of 128 so vregs are full
    # and stores are unmasked.  Zero padding is exact: padded x rows give h == 0 (no
    # bias), so they do not perturb the batch statistics (we divide by the true n),
    # and padded W2 rows/columns contribute 0 / are sliced away.
    k_pad = _round_up(k, LANE)
    h_pad = _round_up(h_dim, LANE)
    o_pad = _round_up(o_dim, LANE)
    tile_n = _round_up(min(tile_n, n), 8)
    n_pad = _round_up(n, tile_n)
    nt = n_pad // tile_n

    x_p = jnp.pad(x, ((0, n_pad - n), (0, k_pad - k)))
    w1_p = jnp.pad(w1, ((0, k_pad - k), (0, h_pad - h_dim))).astype(jnp.bfloat16)
    w2_p = jnp.pad(w2, ((0, h_pad - h_dim), (0, o_pad - o_dim))).astype(jnp.bfloat16)
    b2_p = jnp.pad(b2, (0, o_pad - o_dim)).reshape(1, o_pad)
    gamma_p = jnp.pad(gamma, (0, h_pad - h_dim))
    beta_p = jnp.pad(beta, (0, h_pad - h_dim))

    cparams = pltpu.CompilerParams(
        dimension_semantics=("parallel",),     # shard batch tiles across TCs (v7x)
        vmem_limit_bytes=vmem_limit_bytes,     # explicit budget (<= v7x 64 MiB physical)
    )

    # ---- Phase 1: h = x @ W1 per tile + per-tile BN partial statistics -------------
    h_full, stats = pl.pallas_call(
        _linear_stats_kernel,
        out_shape=(
            jax.ShapeDtypeStruct((n_pad, h_pad), jnp.float32),
            jax.ShapeDtypeStruct((nt, 2, h_pad), jnp.float32),
        ),
        grid_spec=pltpu.PrefetchScalarGridSpec(
            num_scalar_prefetch=0,
            grid=(nt,),
            in_specs=[
                pl.BlockSpec((tile_n, k_pad), lambda i: (i, 0)),    # x row tile
                pl.BlockSpec((k_pad, h_pad), lambda i: (0, 0)),     # W1 stays resident
            ],
            out_specs=(
                pl.BlockSpec((tile_n, h_pad), lambda i: (i, 0)),    # h row tile
                pl.BlockSpec((1, 2, h_pad), lambda i: (i, 0, 0)),   # per-tile stats
            ),
        ),
        compiler_params=cparams,
    )(x_p, w1_p)

    # ---- Cross-tile stat combine + BN affine fold (O(hidden) work, plain XLA) -------
    total = jnp.sum(stats, axis=0)                          # (2, h_pad)
    mean = total[0] / n
    var = jnp.maximum(total[1] / n - mean * mean, 0.0)      # biased var (torch train mode)
    scale = gamma_p * jax.lax.rsqrt(var + BN_EPS)
    shift = beta_p - mean * scale
    scale_shift = jnp.stack([scale, shift], axis=0)         # packed (2, h_pad)

    # ---- Phase 2: folded BN -> ReLU -> second Linear per tile -----------------------
    out_p = pl.pallas_call(
        _bn_relu_linear_kernel,
        out_shape=jax.ShapeDtypeStruct((n_pad, o_pad), jnp.float32),
        grid_spec=pltpu.PrefetchScalarGridSpec(
            num_scalar_prefetch=0,
            grid=(nt,),
            in_specs=[
                pl.BlockSpec((tile_n, h_pad), lambda i: (i, 0)),    # h row tile
                pl.BlockSpec((2, h_pad), lambda i: (0, 0)),         # packed scale/shift
                pl.BlockSpec((h_pad, o_pad), lambda i: (0, 0)),     # W2 stays resident
                pl.BlockSpec((1, o_pad), lambda i: (0, 0)),         # b2
            ],
            out_specs=pl.BlockSpec((tile_n, o_pad), lambda i: (i, 0)),
        ),
        compiler_params=cparams,
    )(h_full, scale_shift, w2_p, b2_p)

    return out_p[:n, :o_dim]


# ---------------------------------------------------------------------------
# Params + pure-JAX reference (exact PyTorch train-mode semantics, f32, with b1)
# ---------------------------------------------------------------------------
def init_params(key, input_dim, hidden_dim, output_dim):
    k1, k2, k3, k4 = jax.random.split(key, 4)
    lim1 = 1.0 / (input_dim ** 0.5)
    lim2 = 1.0 / (hidden_dim ** 0.5)
    w1 = jax.random.uniform(k1, (input_dim, hidden_dim), jnp.float32, -lim1, lim1)
    b1 = jax.random.uniform(k2, (hidden_dim,), jnp.float32, -lim1, lim1)
    gamma = jnp.ones((hidden_dim,), jnp.float32)    # BN weight
    beta = jnp.zeros((hidden_dim,), jnp.float32)    # BN bias
    w2 = jax.random.uniform(k3, (hidden_dim, output_dim), jnp.float32, -lim2, lim2)
    b2 = jax.random.uniform(k4, (output_dim,), jnp.float32, -lim2, lim2)
    return w1, b1, gamma, beta, w2, b2


def reference_forward(x, w1, b1, gamma, beta, w2, b2):
    h = x @ w1 + b1
    mean = jnp.mean(h, axis=0, keepdims=True)
    var = jnp.mean((h - mean) ** 2, axis=0, keepdims=True)
    h = (h - mean) * jax.lax.rsqrt(var + BN_EPS) * gamma + beta
    h = jnp.maximum(h, 0.0)
    return h @ w2 + b2


if __name__ == "__main__":
    batch, input_dim, hidden_dim, output_dim = 16, 32, 64, 16

    key = jax.random.PRNGKey(0)
    kx, kp = jax.random.split(key)
    x = jax.random.normal(kx, (batch, input_dim), jnp.float32)
    params = init_params(kp, input_dim, hidden_dim, output_dim)

    # tile_n=8 -> a 2-step batch grid, exercising resident weights and the
    # cross-tile two-phase BN statistics reduction.
    out = projector_forward(x, *params, tile_n=8)
    out = jax.block_until_ready(out)

    ref = reference_forward(x, *params)
    assert out.shape == (batch, output_dim)
    # Kernel feeds bf16 operands to the MXU (per perf review); reference is all-f32,
    # so compare with a bf16-appropriate tolerance.
    assert jnp.allclose(out, ref, atol=5e-2, rtol=5e-2), "mismatch vs JAX reference"

    print("KERNEL_OK")
</pallas_src>

<mosaic_0001>
module attributes {stable_mosaic.version = 11 : i64} {
  func.func @_linear_stats_kernel(%arg0: i32, %arg1: memref<8x128xf32, #tpu.memory_space<vmem>>, %arg2: memref<128x128xbf16, #tpu.memory_space<vmem>>, %arg3: memref<8x128xf32, #tpu.memory_space<vmem>>, %arg4: memref<1x2x128xf32, #tpu.memory_space<vmem>>) attributes {dimension_semantics = [#tpu.dimension_semantics<parallel>], iteration_bounds = array<i64: 2>, scalar_prefetch = 0 : i64, scratch_operands = 0 : i64, tpu.core_type = #tpu.core_type<tc>, window_params = [{transform_indices = @transform_0, window_bounds = array<i64: 8, 128>}, {pipeline_mode = #tpu.pipeline_mode<synchronous>, transform_indices = @transform_1, window_bounds = array<i64: 128, 128>}, {transform_indices = @transform_2, window_bounds = array<i64: 8, 128>}, {transform_indices = @transform_3, window_bounds = array<i64: 1, 2, 128>}]} {
    %c0 = arith.constant 0 : index
    %c0_0 = arith.constant 0 : index
    %0 = vector.load %arg1[%c0, %c0_0] : memref<8x128xf32, #tpu.memory_space<vmem>>, vector<8x128xf32>
    %1 = arith.truncf %0 : vector<8x128xf32> to vector<8x128xbf16>
    %c0_1 = arith.constant 0 : index
    %c0_2 = arith.constant 0 : index
    %2 = vector.load %arg2[%c0_1, %c0_2] : memref<128x128xbf16, #tpu.memory_space<vmem>>, vector<128x128xbf16>
    %cst = arith.constant dense<0.000000e+00> : vector<8x128xf32>
    %3 = tpu.matmul %1, %2, %cst {dimension_numbers = #tpu.dot_dimension_numbers<[1], [0], [0], [1], [0, 0, 1, 1], [], []>} : vector<8x128xbf16>, vector<128x128xbf16>, vector<8x128xf32> -> vector<8x128xf32>
    %c0_3 = arith.constant 0 : index
    %c0_4 = arith.constant 0 : index
    %4 = vector.load %arg3[%c0_3, %c0_4] : memref<8x128xf32, #tpu.memory_space<vmem>>, vector<8x128xf32>
    tpu.vector_store %arg3[%c0_3, %c0_4], %3 {strides = array<i32>} : memref<8x128xf32, #tpu.memory_space<vmem>>, vector<8x128xf32>,
    %cst_5 = arith.constant dense<0.000000e+00> : vector<128xf32>
    %5 = vector.multi_reduction <add>, %3, %cst_5 [0] : vector<8x128xf32> to vector<128xf32>
    %6 = vector.shape_cast %5 : vector<128xf32> to vector<1x128xf32>
    %7 = arith.mulf %3, %3 : vector<8x128xf32>
    %cst_6 = arith.constant dense<0.000000e+00> : vector<128xf32>
    %8 = vector.multi_reduction <add>, %7, %cst_6 [0] : vector<8x128xf32> to vector<128xf32>
    %9 = vector.shape_cast %8 : vector<128xf32> to vector<1x128xf32>
    %10 = tpu.concatenate %6, %9 in 0 : vector<1x128xf32>, vector<1x128xf32> -> vector<2x128xf32>
    %11 = vector.shape_cast %10 : vector<2x128xf32> to vector<1x2x128xf32>
    %c0_7 = arith.constant 0 : index
    %c0_8 = arith.constant 0 : index
    %c0_9 = arith.constant 0 : index
    %12 = vector.load %arg4[%c0_7, %c0_8, %c0_9] : memref<1x2x128xf32, #tpu.memory_space<vmem>>, vector<1x2x128xf32>
    tpu.vector_store %arg4[%c0_7, %c0_8, %c0_9], %11 {strides = array<i32>} : memref<1x2x128xf32, #tpu.memory_space<vmem>>, vector<1x2x128xf32>,
    return
  }
  func.func @transform_0(%arg0: i32) -> (i32, i32) {
    %c0_i32 = arith.constant 0 : i32
    %c0_i32_0 = arith.constant 0 : i32
    return %arg0, %c0_i32 : i32, i32
  }
  func.func @transform_1(%arg0: i32) -> (i32, i32) {
    %c0_i32 = arith.constant 0 : i32
    %c0_i32_0 = arith.constant 0 : i32
    %c0_i32_1 = arith.constant 0 : i32
    return %c0_i32, %c0_i32_0 : i32, i32
  }
  func.func @transform_2(%arg0: i32) -> (i32, i32) {
    %c0_i32 = arith.constant 0 : i32
    %c0_i32_0 = arith.constant 0 : i32
    return %arg0, %c0_i32 : i32, i32
  }
  func.func @transform_3(%arg0: i32) -> (i32, i32, i32) {
    %c0_i32 = arith.constant 0 : i32
    %c0_i32_0 = arith.constant 0 : i32
    %c0_i32_1 = arith.constant 0 : i32
    return %arg0, %c0_i32, %c0_i32_0 : i32, i32, i32
  }
}

</mosaic_0001>

<llo_original>
// kernel: tpu_custom_call.1
$region0: #{tpu_custom_call.1}
  #allocation0 [shape = 'u32[]', space=smem, size = 0x4, offset = 0x4, fixed_abs, tag = 'smem constant byte address 0x4 - core index']
  #allocation1 [shape = 'u32[144,128]{1,0:T(1,128)}', space=vmem, size = 0x12000, scoped, tag = 'internal scratch']
  %s0 = inlined_call_operand.hbm [shape: f32[16,128], index: 0, kind: input, shape index: {}]
  %s1 = inlined_call_operand.hbm [shape: bf16[128,128], index: 1, kind: input, shape index: {}]
  %s2 = inlined_call_operand.hbm [shape: f32[16,128], index: 2, kind: output, shape index: {0}]
  %s3 = inlined_call_operand.hbm [shape: f32[2,2,128], index: 3, kind: output, shape index: {1}]
  %4 = xla_tuple %s2, %s3
  %s5 = sld [smem:[#allocation0]]
  $region57: #{tpu_custom_call.1} parent=0
    _
  %s7 = ssub.s32 1, %s5
  %s8 = scalar_select 0, %s7, %s5
  $region1: #{tpu_custom_call.1} parent=0
    #allocation2 [shape = 'u8[8192]{0}', space=vmem, size = 0x2000, scoped, tag = 'input window, operand 0']
    #allocation3 [shape = 's32[2]{0}', space=sflag, size = 0x8, scoped, tag = 'scoped memory for tpu_custom_call.1']
    #allocation4 [shape = 's32[2]{0}', space=sflag, size = 0x8, scoped, tag = 'scoped memory for tpu_custom_call.1']
    #allocation5 [shape = 'u8[32768]{0}', space=vmem, size = 0x8000, scoped, tag = 'input window, operand 1, single buffered']
    #allocation6 [shape = 's32[1]{0}', space=sflag, size = 0x4, scoped, tag = 'scoped memory for tpu_custom_call.1']
    #allocation7 [shape = 'u8[8192]{0}', space=vmem, size = 0x2000, scoped, tag = 'output window, operand 0']
    #allocation8 [shape = 'u8[2048]{0}', space=vmem, size = 0x800, scoped, tag = 'output window, operand 1']
    #allocation9 [shape = 's32[2]{0}', space=sflag, size = 0x8, scoped, tag = 'scoped memory for tpu_custom_call.1']
    %9 = vsyncpa [#allocation3], 0
    %s10 = scalar_lea.sflag [#allocation3], 1
    %11 = vsyncpa %s10, 0
    %12 = vsyncpa [#allocation6], 0
    %13 = vsyncpa [#allocation4], 0
    %s14 = scalar_lea.sflag [#allocation4], 1
    %15 = vsyncpa %s14, 0
    %16 = vsyncpa [#allocation9], 0
    %s17 = scalar_lea.sflag [#allocation9], 1
    %18 = vsyncpa %s17, 0
    loop: start=0, step=1, limit=4
    $region2: #{tpu_custom_call.1} parent=1 // loop_pre_header
      _
    $region3: #{tpu_custom_call.1} parent=1 // loop_header
      %s20 = sphi 0, %s24
      %p21 = scmp.ge.s32.totalorder %s20, 4
      %s30 = sphi 0, %s32
      %s33 = sphi 0, %s30
      %s34 = sphi 0, %s33
      %s50 = sphi 0, %s34
      %s54 = sphi 0, %s54
      %s56 = sphi 0, %s54
      %s57 = sphi 0, %s56
      %s71 = sphi 0, %s57
      %s77 = sphi 0, %s79
      %s80 = sphi 0, %s77
      %s81 = sphi 0, %s80
      %s97 = sphi 0, %s81
      %s103 = sphi 0, %s105
      %s106 = sphi 0, %s103
      %s107 = sphi 0, %s106
      %s123 = sphi 0, %s107
    $region4: #{tpu_custom_call.1} parent=1 // loop_header_branch
      %23 = sbr.rel (%p21) target = $region8
    $region5: #{tpu_custom_call.1} parent=1 // loop_body
      %s25 = ssub.s32 %s20, 1
      %s26 = ssub.s32 %s20, 2
      %s27 = sadd.s32 %s20, 1
      %s28 = ssub.s32 %s20, %s27
      %p29 = scmp.eq.s32.totalorder %s28, 0
      %s31 = sadd.s32 %s30, 1
      %s32 = scalar_select %p29, %s30, %s31
      %p35 = pneg %p29
      %p36 = scmp.eq.s32.totalorder %s20, 1
      %p37 = por %p35, %p36
      %p38 = scmp.ne.s32.totalorder %s30, %s33
      %p39 = scmp.eq.s32.totalorder %s20, 0
      %p40 = por %p38, %p39
      %p41 = scmp.ne.s32.totalorder %s30, %s33
      %p42 = scmp.eq.s32.totalorder %s25, 1
      %p43 = por %p41, %p42
      %p44 = scmp.ne.s32.totalorder %s33, %s34
      %p45 = scmp.eq.s32.totalorder %s25, 0
      %p46 = por %p44, %p45
      %p47 = scmp.ne.s32.totalorder %s33, %s34
      %p48 = scmp.eq.s32.totalorder %s26, 1
      %p49 = por %p47, %p48
      %p51 = scmp.ne.s32.totalorder %s34, %s50
      %p52 = scmp.eq.s32.totalorder %s26, 0
      %p53 = por %p51, %p52
      %s55 = sadd.s32 %s54, 1
      %p58 = scmp.eq.s32.totalorder %s20, 1
      %p59 = scmp.ne.s32.totalorder %s54, %s56
      %p60 = scmp.eq.s32.totalorder %s20, 0
      %p61 = por %p59, %p60
      %p62 = scmp.ne.s32.totalorder %s54, %s56
      %p63 = scmp.eq.s32.totalorder %s25, 1
      %p64 = por %p62, %p63
      %p65 = scmp.ne.s32.totalorder %s56, %s57
      %p66 = scmp.eq.s32.totalorder %s25, 0
      %p67 = por %p65, %p66
      %p68 = scmp.ne.s32.totalorder %s56, %s57
      %p69 = scmp.eq.s32.totalorder %s26, 1
      %p70 = por %p68, %p69
      %p72 = scmp.ne.s32.totalorder %s57, %s71
      %p73 = scmp.eq.s32.totalorder %s26, 0
      %p74 = por %p72, %p73
      %s75 = ssub.s32 %s20, %s27
      %p76 = scmp.eq.s32.totalorder %s75, 0
      %s78 = sadd.s32 %s77, 1
      %s79 = scalar_select %p76, %s77, %s78
      %p82 = pneg %p76
      %p83 = scmp.eq.s32.totalorder %s20, 1
      %p84 = por %p82, %p83
      %p85 = scmp.ne.s32.totalorder %s77, %s80
      %p86 = scmp.eq.s32.totalorder %s20, 0
      %p87 = por %p85, %p86
      %p88 = scmp.ne.s32.totalorder %s77, %s80
      %p89 = scmp.eq.s32.totalorder %s25, 1
      %p90 = por %p88, %p89
      %p91 = scmp.ne.s32.totalorder %s80, %s81
      %p92 = scmp.eq.s32.totalorder %s25, 0
      %p93 = por %p91, %p92
      %p94 = scmp.ne.s32.totalorder %s80, %s81
      %p95 = scmp.eq.s32.totalorder %s26, 1
      %p96 = por %p94, %p95
      %p98 = scmp.ne.s32.totalorder %s81, %s97
      %p99 = scmp.eq.s32.totalorder %s26, 0
      %p100 = por %p98, %p99
      %s101 = ssub.s32 %s20, %s27
      %p102 = scmp.eq.s32.totalorder %s101, 0
      %s104 = sadd.s32 %s103, 1
      %s105 = scalar_select %p102, %s103, %s104
      %p108 = pneg %p102
      %p109 = scmp.eq.s32.totalorder %s20, 1
      %p110 = por %p108, %p109
      %p111 = scmp.ne.s32.totalorder %s103, %s106
      %p112 = scmp.eq.s32.totalorder %s20, 0
      %p113 = por %p111, %p112
      %p114 = scmp.ne.s32.totalorder %s103, %s106
      %p115 = scmp.eq.s32.totalorder %s25, 1
      %p116 = por %p114, %p115
      %p117 = scmp.ne.s32.totalorder %s106, %s107
      %p118 = scmp.eq.s32.totalorder %s25, 0
      %p119 = por %p117, %p118
      %p120 = scmp.ne.s32.totalorder %s106, %s107
      %p121 = scmp.eq.s32.totalorder %s26, 1
      %p122 = por %p120, %p121
      %p124 = scmp.ne.s32.totalorder %s107, %s123
      %p125 = scmp.eq.s32.totalorder %s26, 0
      %p126 = por %p124, %p125
      %p127 = scmp.le.s32.totalorder 1, %s20
      %p128 = scmp.lt.s32.totalorder %s20, 3
      %p129 = pnand %p127, %p128
      %p130 = pneg %p129
      // Predicated region
      $region9: #{tpu_custom_call.1} parent=5 // pred_check
        _
      $region10: #{tpu_custom_call.1} parent=5 // pred_check_branch
        %132 = sbr.rel (%p129) target = $region12
      $region11: #{tpu_custom_call.1} parent=5 // pred_region
        %s133 = ssub.s32 %s20, 1
        // Predicated region
        $region13: #{tpu_custom_call.1} parent=11 // pred_check
          %p134 = pneg %p67
        $region14: #{tpu_custom_call.1} parent=11 // pred_check_branch
          %136 = sbr.rel (%p134) target = $region16
        $region15: #{tpu_custom_call.1} parent=11 // pred_region
          %s138 = ssub.s32 1024, 1024
          %139 = vsyncadd [#allocation6], %s138
          %s140 = sshll.u32 [#allocation5], 4
          %s141 = int_to_ptr.vmem [resolvable:$true] %s140
          %146 = dma.hbm_to_vmem [thread:$0]  %s1, 1024, %s141, [#allocation6], 64, 64, 4
        $region16: #{tpu_custom_call.1} parent=11 // pred_fallthru
          _
      $region12: #{tpu_custom_call.1} parent=5 // pred_fallthru
        _
      %p147 = scmp.lt.s32.totalorder %s20, 2
      // Predicated region
      $region17: #{tpu_custom_call.1} parent=5 // pred_check
        %p148 = pneg %p147
      $region18: #{tpu_custom_call.1} parent=5 // pred_check_branch
        %150 = sbr.rel (%p148) target = $region20
      $region19: #{tpu_custom_call.1} parent=5 // pred_region
        // Predicated region
        $region21: #{tpu_custom_call.1} parent=19 // pred_check
          %p151 = pneg %p40
        $region22: #{tpu_custom_call.1} parent=19 // pred_check_branch
          %153 = sbr.rel (%p151) target = $region24
        $region23: #{tpu_custom_call.1} parent=19 // pred_region
          %s154 = sand.u32 %s30, 1
          %s155 = scalar_lea.sflag [#allocation3], %s154
          %s156 = sand.u32 %s30, 1
          %s157 = smul.addr %s156, 8
          %s158 = scalar_lea.vmem [#allocation2], %s157
          %s160 = ssub.s32 128, 128
          %161 = vsyncadd %s155, %s160
          %s162 = smul.addr %s20, 128
          %s163 = scalar_lea.hbm %s0, %s162
          %s165 = sshll.u32 %s158, 4
          %s166 = int_to_ptr.vmem [resolvable:$true] %s165
          %168 = dma.hbm_to_vmem [thread:$0]  %s163, 128, %s166, %s155
        $region24: #{tpu_custom_call.1} parent=19 // pred_fallthru
          _
      $region20: #{tpu_custom_call.1} parent=5 // pred_fallthru
        _
      %p169 = scmp.le.s32.totalorder 1, %s20
      %p170 = scmp.lt.s32.totalorder %s20, 3
      %p171 = pnand %p169, %p170
      %p172 = pneg %p171
      // Predicated region
      $region25: #{tpu_custom_call.1} parent=5 // pred_check
        _
      $region26: #{tpu_custom_call.1} parent=5 // pred_check_branch
        %174 = sbr.rel (%p171) target = $region28
      $region27: #{tpu_custom_call.1} parent=5 // pred_region
        %s175 = ssub.s32 %s20, 1
        %s176 = sand.u32 %s33, 1
        %s177 = scalar_lea.sflag [#allocation3], %s176
        %s178 = sand.u32 %s33, 1
        %s179 = smul.addr %s178, 8
        %s180 = scalar_lea.vmem [#allocation2], %s179
        // Predicated region
        $region29: #{tpu_custom_call.1} parent=27 // pred_check
          %p181 = pneg %p46
        $region30: #{tpu_custom_call.1} parent=27 // pred_check_branch
          %183 = sbr.rel (%p181) target = $region32
        $region31: #{tpu_custom_call.1} parent=27 // pred_region
          %184 = dma.done %s177, 128
        $region32: #{tpu_custom_call.1} parent=27 // pred_fallthru
          _
        // Predicated region
        $region33: #{tpu_custom_call.1} parent=27 // pred_check
          %p185 = pneg %p67
        $region34: #{tpu_custom_call.1} parent=27 // pred_check_branch
          %187 = sbr.rel (%p185) target = $region36
        $region35: #{tpu_custom_call.1} parent=27 // pred_region
          %188 = dma.done [#allocation6], 1024
        $region36: #{tpu_custom_call.1} parent=27 // pred_fallthru
          _
        %s189 = sand.u32 %s33, 1
        %s190 = scalar_lea.sflag [#allocation3], %s189
        %s191 = sand.u32 %s33, 1
        %s192 = smul.addr %s191, 8
        %s193 = scalar_lea.vmem [#allocation2], %s192
        %p194 = pneg %p46
        %p195 = pneg %p43
        %p196 = pneg %p67
        %p197 = pneg %p64
        %p198 = pneg %p93
        %p199 = pneg %p90
        %s200 = sand.u32 %s80, 1
        %s201 = scalar_lea.sflag [#allocation4], %s200
        %s202 = sand.u32 %s80, 1
        %s203 = smul.addr %s202, 8
        %s204 = scalar_lea.vmem [#allocation7], %s203
        %p205 = pneg %p119
        %p206 = pneg %p116
        %s207 = sand.u32 %s106, 1
        %s208 = scalar_lea.sflag [#allocation9], %s207
        %s209 = sand.u32 %s106, 1
        %s210 = smul.addr %s209, 2
        %s211 = scalar_lea.vmem [#allocation8], %s210
        %v213 = vld [vmem:[%s180] sm:$0xff]
        %v214 = vpack.c.bf16 %v213, %v213
        %v215 = vld [vmem:[#allocation5] sm:$0xf]
        %v216 = vld [vmem:[#allocation5 + $0x4] sm:$0xf]
        %v217 = vld [vmem:[#allocation5 + $0x8] sm:$0xf]
        %v218 = vld [vmem:[#allocation5 + $0xc] sm:$0xf]
        %v219 = vld [vmem:[#allocation5 + $0x10] sm:$0xf]
        %v220 = vld [vmem:[#allocation5 + $0x14] sm:$0xf]
        %v221 = vld [vmem:[#allocation5 + $0x18] sm:$0xf]
        %v222 = vld [vmem:[#allocation5 + $0x1c] sm:$0xf]
        %v223 = vld [vmem:[#allocation5 + $0x20] sm:$0xf]
        %v224 = vld [vmem:[#allocation5 + $0x24] sm:$0xf]
        %v225 = vld [vmem:[#allocation5 + $0x28] sm:$0xf]
        %v226 = vld [vmem:[#allocation5 + $0x2c] sm:$0xf]
        %v227 = vld [vmem:[#allocation5 + $0x30] sm:$0xf]
        %v228 = vld [vmem:[#allocation5 + $0x34] sm:$0xf]
        %v229 = vld [vmem:[#allocation5 + $0x38] sm:$0xf]
        %v230 = vld [vmem:[#allocation5 + $0x3c] sm:$0xf]
        %v247 = vunpack.c.l.b16 %v215
        %v248 = vunpack.c.l.b16 %v216
        %v249 = vunpack.c.l.b16 %v217
        %v250 = vunpack.c.l.b16 %v218
        %v251 = vunpack.c.l.b16 %v219
        %v252 = vunpack.c.l.b16 %v220
        %v253 = vunpack.c.l.b16 %v221
        %v254 = vunpack.c.l.b16 %v222
        %v255 = vunpack.c.l.b16 %v223
        %v256 = vunpack.c.l.b16 %v224
        %v257 = vunpack.c.l.b16 %v225
        %v258 = vunpack.c.l.b16 %v226
        %v259 = vunpack.c.l.b16 %v227
        %v260 = vunpack.c.l.b16 %v228
        %v261 = vunpack.c.l.b16 %v229
        %v262 = vunpack.c.l.b16 %v230
        %v263 = vpack.c.b16 %v248, %v247
        %v264 = vpack.c.b16 %v250, %v249
        %v265 = vpack.c.b16 %v252, %v251
        %v266 = vpack.c.b16 %v254, %v253
        %v267 = vpack.c.b16 %v256, %v255
        %v268 = vpack.c.b16 %v258, %v257
        %v269 = vpack.c.b16 %v260, %v259
        %v270 = vpack.c.b16 %v262, %v261
        %279 = vmatprep.subr.bf16.mxu0 0
        %280 = vmatpush1.bf16.msra.mxu0 %v270
        %281 = vmatprep.subr.bf16.mxu0 0
        %282 = vmatpush1.bf16.msra.mxu0 %v269
        %283 = vmatprep.subr.bf16.mxu0 0
        %284 = vmatpush1.bf16.msra.mxu0 %v268
        %285 = vmatprep.subr.bf16.mxu0 0
        %286 = vmatpush1.bf16.msra.mxu0 %v267
        %287 = vmatprep.subr.bf16.mxu0 0
        %288 = vmatpush1.bf16.msra.mxu0 %v266
        %289 = vmatprep.subr.bf16.mxu0 0
        %290 = vmatpush1.bf16.msra.mxu0 %v265
        %291 = vmatprep.subr.bf16.mxu0 0
        %292 = vmatpush1.bf16.msra.mxu0 %v264
        %293 = vmatprep.subr.bf16.mxu0 0
        %294 = vmatpush1.bf16.msra.mxu0 %v263
        %295 = vmatprep.subr.bf16.mxu0 0
        %296 = vmatpush2.bf16.msra.mxu0 0
        %297 = vmatprep.subr.bf16.mxu0 0
        %298 = vmatpush2.bf16.msra.mxu0 0
        %299 = vmatprep.subr.bf16.mxu0 0
        %300 = vmatpush2.bf16.msra.mxu0 0
        %301 = vmatprep.subr.bf16.mxu0 0
        %302 = vmatpush2.bf16.msra.mxu0 0
        %303 = vmatprep.subr.bf16.mxu0 0
        %304 = vmatpush2.bf16.msra.mxu0 0
        %305 = vmatprep.subr.bf16.mxu0 0
        %306 = vmatpush2.bf16.msra.mxu0 0
        %307 = vmatprep.subr.bf16.mxu0 0
        %308 = vmatpush2.bf16.msra.mxu0 0
        %309 = vmatprep.subr.bf16.mxu0 0
        %310 = vmatpush2.bf16.msra.mxu0 0
        %311 = vmatprep.mubr.bf16.mxu0 0
        %312 = vmatmul.mubr.bf16.gmra.mxu0 %v214
        %v313 = vpop.f32.mrf.mxu0
        %v314 = vadd.f32 0.0, %v313
        %v315 = vpop.f32.mrf.mxu0
        %v316 = vpop.f32.mrf.mxu0
        %v317 = vpop.f32.mrf.mxu0
        %318 = vdwg.mxu0
        %319 = vst [vmem:[%s204] sm:$0xff] %v314
        %v320 = vrot.slane %v314, 4
        %v321 = vadd.f32 %v314, %v320
        %v322 = vrot.slane %v321, 2
        %v323 = vadd.f32 %v321, %v322
        %v324 = vrot.slane %v323, 1
        %v325 = vadd.f32 %v323, %v324
        %v326 = vmul.f32 %v314, %v314
        %v327 = vrot.slane %v326, 4
        %v328 = vadd.f32 %v326, %v327
        %v329 = vrot.slane %v328, 2
        %v330 = vadd.f32 %v328, %v329
        %v331 = vrot.slane %v330, 1
        %v332 = vadd.f32 %v330, %v331
        %vm333 = vcmask 1040384
        %v334 = vsel %vm333, %v325, %v332
        %335 = vst [vmem:[%s211] sm:$0x3] %v334
        %s336 = sand.u32 %s80, 1
        %s337 = scalar_lea.sflag [#allocation4], %s336
        %s338 = sand.u32 %s80, 1
        %s339 = smul.addr %s338, 8
        %s340 = scalar_lea.vmem [#allocation7], %s339
        %s341 = sand.u32 %s106, 1
        %s342 = scalar_lea.sflag [#allocation9], %s341
        %s343 = sand.u32 %s106, 1
        %s344 = smul.addr %s343, 2
        %s345 = scalar_lea.vmem [#allocation8], %s344
        // Predicated region
        $region37: #{tpu_custom_call.1} parent=27 // pred_check
          %p346 = pneg %p90
        $region38: #{tpu_custom_call.1} parent=27 // pred_check_branch
          %348 = sbr.rel (%p346) target = $region40
        $region39: #{tpu_custom_call.1} parent=27 // pred_region
          %s350 = ssub.s32 128, 128
          %351 = vsyncadd %s337, %s350
          %s352 = smul.addr %s25, 128
          %s353 = scalar_lea.hbm %s2, %s352
          %s355 = sshll.u32 %s340, 4
          %s356 = int_to_ptr.vmem [resolvable:$true] %s355
          %358 = dma.vmem_to_hbm [thread:$0]  %s356, 128, %s353, %s337
        $region40: #{tpu_custom_call.1} parent=27 // pred_fallthru
          _
        // Predicated region
        $region41: #{tpu_custom_call.1} parent=27 // pred_check
          %p359 = pneg %p116
        $region42: #{tpu_custom_call.1} parent=27 // pred_check_branch
          %361 = sbr.rel (%p359) target = $region44
        $region43: #{tpu_custom_call.1} parent=27 // pred_region
          %s363 = ssub.s32 32, 32
          %364 = vsyncadd %s342, %s363
          %s365 = smul.addr %s25, 32
          %s366 = scalar_lea.hbm %s3, %s365
          %s368 = sshll.u32 %s345, 4
          %s369 = int_to_ptr.vmem [resolvable:$true] %s368
          %371 = dma.vmem_to_hbm [thread:$0]  %s369, 32, %s366, %s342
        $region44: #{tpu_custom_call.1} parent=27 // pred_fallthru
          _
      $region28: #{tpu_custom_call.1} parent=5 // pred_fallthru
        _
      %p372 = scmp.le.s32.totalorder 2, %s20
      // Predicated region
      $region45: #{tpu_custom_call.1} parent=5 // pred_check
        %p373 = pneg %p372
      $region46: #{tpu_custom_call.1} parent=5 // pred_check_branch
        %375 = sbr.rel (%p373) target = $region48
      $region47: #{tpu_custom_call.1} parent=5 // pred_region
        %s376 = ssub.s32 %s20, 2
        // Predicated region
        $region49: #{tpu_custom_call.1} parent=47 // pred_check
          %p377 = pneg %p96
        $region50: #{tpu_custom_call.1} parent=47 // pred_check_branch
          %379 = sbr.rel (%p377) target = $region52
        $region51: #{tpu_custom_call.1} parent=47 // pred_region
          %s380 = sand.u32 %s81, 1
          %s381 = scalar_lea.sflag [#allocation4], %s380
          %s382 = sand.u32 %s81, 1
          %s383 = smul.addr %s382, 8
          %s384 = scalar_lea.vmem [#allocation7], %s383
          %385 = dma.done %s381, 128
        $region52: #{tpu_custom_call.1} parent=47 // pred_fallthru
          _
        // Predicated region
        $region53: #{tpu_custom_call.1} parent=47 // pred_check
          %p386 = pneg %p122
        $region54: #{tpu_custom_call.1} parent=47 // pred_check_branch
          %388 = sbr.rel (%p386) target = $region56
        $region55: #{tpu_custom_call.1} parent=47 // pred_region
          %s389 = sand.u32 %s107, 1
          %s390 = scalar_lea.sflag [#allocation9], %s389
          %s391 = sand.u32 %s107, 1
          %s392 = smul.addr %s391, 2
          %s393 = scalar_lea.vmem [#allocation8], %s392
          %394 = dma.done %s390, 32
        $region56: #{tpu_custom_call.1} parent=47 // pred_fallthru
          _
      $region48: #{tpu_custom_call.1} parent=5 // pred_fallthru
        _
    $region6: #{tpu_custom_call.1} parent=1 // loop_footer
      %s24 = sadd.s32 1, %s20
    $region7: #{tpu_custom_call.1} parent=1 // loop_footer_branch
      %19 = sbr.rel target = $region3
    $region8: #{tpu_custom_call.1} parent=1 // loop_exit
      _
    %395 = vsyncpa [#allocation3], 1
    %s396 = scalar_lea.sflag [#allocation3], 1
    %397 = vsyncpa %s396, 1
    %398 = vsyncpa [#allocation6], 1
    %399 = vsyncpa [#allocation4], 1
    %s400 = scalar_lea.sflag [#allocation4], 1
    %401 = vsyncpa %s400, 1
    %402 = vsyncpa [#allocation9], 1
    %s403 = scalar_lea.sflag [#allocation9], 1
    %404 = vsyncpa %s403, 1

</llo_original>
